<compile_context>
chip_gen: v7x
topology: tpu7x:2x2x1
jax: 0.10.0
libtpu: 0.0.40
codegen_flags: <defaults>
</compile_context>

<pallas_src>
import functools

import jax
import jax.numpy as jnp
from jax import lax
from jax.experimental import pallas as pl
from jax.experimental.pallas import tpu as pltpu


def dtc_kernel(x_ref, cw_ref, cb_ref,
               w1ih_ref, w1hh_ref, b1_ref,
               w2ih_ref, b2_ref, whh2_ref,
               out_ref,
               xg1_scr, h1_scr, xg2_scr,
               *, mp_kernel, np_pack):
    NP = np_pack                              # samples packed on the sublanes
    H = w1hh_ref.shape[0]                     # embedding_dim
    L2 = h1_scr.shape[0] // NP                # pooled sequence length

    # ---------- Conv1d + bias + LeakyReLU fused with MaxPool1d --------------
    # x_ref[w] holds the im2col rows of pool-window tap w for every *surviving*
    # pooled position (pool stride pre-applied by the wrapper), rows ordered
    # (time-major, sample-minor): row = t*NP + b.
    # max(leaky(y + bias)) == leaky(max(y) + bias) since +bias and LeakyReLU
    # are monotone, so bias/activation are applied once, after the max.
    cw = cw_ref[...]
    wmax = jnp.dot(x_ref[0], cw, preferred_element_type=jnp.float32)
    for w in range(1, mp_kernel):
        wmax = jnp.maximum(
            wmax, jnp.dot(x_ref[w], cw, preferred_element_type=jnp.float32))
    act = wmax + cb_ref[...]
    act = jnp.where(act >= 0.0, act, 0.01 * act)           # (L2*NP, Cout)

    # ---------- LSTM layer one: input projection (one MXU matmul) -----------
    # gates pre-ordered (i, f, o, g) by the wrapper
    xg1_scr[...] = jnp.dot(act, w1ih_ref[...],
                           preferred_element_type=jnp.float32) + b1_ref[...]

    # ---------- LSTM layer one: forward recurrence (batch on sublanes) ------
    w1hh = w1hh_ref[...]                                   # (H, 4H)

    def l1_step(t, carry):
        h, c = carry                                       # (NP, H) each
        r0 = pl.multiple_of(t * NP, NP)
        # recurrent h @ W_hh on the VPU: broadcast-MACs + adder tree; each op
        # now covers NP=8 sublane rows.  (MXU would pay systolic latency on
        # the serial chain for ~1% utilisation -- keep it off the MXU.)
        prods = [h[:, j:j + 1] * w1hh[j:j + 1, :] for j in range(H)]
        while len(prods) > 1:
            nxt = [prods[i] + prods[i + 1] for i in range(0, len(prods) - 1, 2)]
            if len(prods) % 2:
                nxt.append(prods[-1])
            prods = nxt
        g = xg1_scr[pl.ds(r0, NP), :] + prods[0]           # (NP, 4H)
        sg = jax.nn.sigmoid(g[:, 0:3 * H])                 # i | f | o
        gg = jnp.tanh(g[:, 3 * H:4 * H])                   # g
        c = sg[:, H:2 * H] * c + sg[:, 0:H] * gg
        h = sg[:, 2 * H:3 * H] * jnp.tanh(c)
        h1_scr[pl.ds(r0, NP), :] = h
        return (h, c)

    zero_h = jnp.zeros((NP, H), jnp.float32)
    lax.fori_loop(0, L2, l1_step, (zero_h, zero_h))

    # ---------- LSTM layer two: merged fwd/bwd input projection -------------
    # w2ih columns interleaved [i_f,i_b,f_f,f_b,o_f,o_b,g_f,g_b]; the module's
    # "x + x" factor of 2 is folded into the weight (exact, power of two).
    xg2_scr[...] = jnp.dot(h1_scr[...], w2ih_ref[...],
                           preferred_element_type=jnp.float32) + b2_ref[...]

    # ---------- LSTM layer two: both directions in ONE loop -----------------
    whh2 = whh2_ref[...]                                   # (1, 8)
    fwd_mask = (lax.broadcasted_iota(jnp.int32, (1, 8), 1) & 1) == 0
    col_ids = lax.broadcasted_iota(jnp.int32, (1, L2), 1)

    def l2_step(s, carry):
        h2, c2, of, ob = carry                             # (NP,2)x2, (NP,L2)x2
        rb = L2 - 1 - s
        row_f = xg2_scr[pl.ds(pl.multiple_of(s * NP, NP), NP), :]
        row_b = xg2_scr[pl.ds(pl.multiple_of(rb * NP, NP), NP), :]
        g_pre = jnp.where(fwd_mask, row_f, row_b)          # (NP, 8)
        h_rep = jnp.concatenate([h2, h2, h2, h2], axis=1)  # (NP, 8)
        g = g_pre + h_rep * whh2
        sg = jax.nn.sigmoid(g[:, 0:6])                     # [i_f,i_b,f_f,f_b,o_f,o_b]
        gg = jnp.tanh(g[:, 6:8])                           # [g_f, g_b]
        c2 = sg[:, 2:4] * c2 + sg[:, 0:2] * gg
        h2 = sg[:, 4:6] * jnp.tanh(c2)
        of = jnp.where(col_ids == s, h2[:, 0:1], of)
        ob = jnp.where(col_ids == rb, h2[:, 1:2], ob)
        return (h2, c2, of, ob)

    zero2 = jnp.zeros((NP, 2), jnp.float32)
    zero_t = jnp.zeros((NP, L2), jnp.float32)
    _, _, out_f, out_b = lax.fori_loop(0, L2, l2_step,
                                       (zero2, zero2, zero_t, zero_t))

    # single lane-dense store of the whole (NP, L2) output slab
    out_ref[...] = (out_f + out_b).astype(out_ref.dtype)


def dtc_encoder_forward(x_ncl, params, cfg, np_pack=8):
    """x_ncl: (B, input_dim, L) float32 (PyTorch NCL layout)."""
    B, Cin, L = x_ncl.shape
    K, s_c = cfg['cnn_kernel'], cfg['cnn_stride']
    Cout, H = cfg['cnn_channels'], cfg['embedding_dim']
    mp_k, mp_s = cfg['mp_kernel'], cfg['mp_stride']
    L1 = (L - K) // s_c + 1
    L2 = (L1 - mp_k) // mp_s + 1
    NP = np_pack
    G = pl.cdiv(B, NP)
    B_pad = G * NP
    f32 = jnp.float32

    # ---------------- input prep: pool-strided im2col, batch packed ---------
    x_btc = jnp.transpose(x_ncl, (0, 2, 1)).astype(f32)       # (B, L, Cin)
    x_p = jnp.pad(x_btc, ((0, B_pad - B), (0, 0), (0, 0)))    # zero-pad batch
    # t_idx[w, t, k] = input row feeding conv tap k at pooled position t, pool tap w
    t_idx = ((jnp.arange(L2)[None, :, None] * mp_s
              + jnp.arange(mp_k)[:, None, None]) * s_c
             + jnp.arange(K)[None, None, :])                  # (mp_k, L2, K)
    x_g = x_p[:, t_idx, :]                                    # (B_pad, mp_k, L2, K, Cin)
    x_g = jnp.transpose(x_g, (1, 0, 2, 3, 4))                 # (mp_k, B_pad, L2, K, Cin)
    x_g = x_g.reshape(mp_k, G, NP, L2, K * Cin)
    x_g = jnp.transpose(x_g, (0, 1, 3, 2, 4))                 # (mp_k, G, L2, NP, K*Cin)
    x_w = x_g.reshape(mp_k, G * L2 * NP, K * Cin)             # rows = (g, t, b)

    # ---------------- weight prep (plain JAX glue) ---------------------------
    # conv weight in im2col layout: (K*Cin, Cout)
    cw = jnp.transpose(params['conv_w'], (2, 1, 0)).reshape(K * Cin, Cout).astype(f32)
    cb = params['conv_b'].reshape(1, Cout).astype(f32)

    # LSTM-1: reorder PyTorch gate rows (i,f,g,o) -> (i,f,o,g)
    perm1 = jnp.concatenate([jnp.arange(0, 2 * H),
                             jnp.arange(3 * H, 4 * H),
                             jnp.arange(2 * H, 3 * H)])
    w1ih = params['l1_w_ih'][perm1, :].T.astype(f32)           # (Cout, 4H)
    w1hh = params['l1_w_hh'][perm1, :].T.astype(f32)           # (H, 4H)
    b1 = (params['l1_b_ih'] + params['l1_b_hh'])[perm1].reshape(1, 4 * H).astype(f32)

    # LSTM-2: reorder gates, merge fwd/bwd, interleave columns per gate, fold
    # the module's "x + x" (factor 2) into the input weight (exact).
    perm2 = jnp.array([0, 1, 3, 2])
    w2f = params['l2f_w_ih'][perm2, :].T.astype(f32)           # (H, 4)
    w2b = params['l2b_w_ih'][perm2, :].T.astype(f32)
    w2ih = (2.0 * jnp.stack([w2f, w2b], axis=2).reshape(H, 8)).astype(f32)
    b2f = (params['l2f_b_ih'] + params['l2f_b_hh'])[perm2]
    b2b = (params['l2b_b_ih'] + params['l2b_b_hh'])[perm2]
    b2 = jnp.stack([b2f, b2b], axis=1).reshape(1, 8).astype(f32)
    whh2f = params['l2f_w_hh'][perm2, 0]
    whh2b = params['l2b_w_hh'][perm2, 0]
    whh2 = jnp.stack([whh2f, whh2b], axis=1).reshape(1, 8).astype(f32)

    weights = (cw, cb, w1ih, w1hh, b1, w2ih, b2, whh2)

    def full_spec(a):
        nd = a.ndim
        return pl.BlockSpec(a.shape, lambda i, nd=nd: (0,) * nd)

    kernel = functools.partial(dtc_kernel, mp_kernel=mp_k, np_pack=NP)

    out = pl.pallas_call(
        kernel,
        out_shape=jax.ShapeDtypeStruct((B_pad, L2), jnp.float32),
        grid_spec=pltpu.PrefetchScalarGridSpec(
            num_scalar_prefetch=0,
            grid=(G,),                                  # 8 samples per step
            in_specs=[pl.BlockSpec((mp_k, L2 * NP, K * Cin), lambda i: (0, i, 0))]
                     + [full_spec(a) for a in weights],
            out_specs=pl.BlockSpec((NP, L2), lambda i: (i, 0)),
            scratch_shapes=[
                pltpu.VMEM((L2 * NP, 4 * H), jnp.float32),   # layer-1 gate pre-acts
                pltpu.VMEM((L2 * NP, H), jnp.float32),       # layer-1 hidden states
                pltpu.VMEM((L2 * NP, 8), jnp.float32),       # layer-2 gate pre-acts
            ]),
        compiler_params=pltpu.CompilerParams(
            dimension_semantics=("parallel",),
            vmem_limit_bytes=32 * 1024 * 1024),
    )(x_w, *weights)

    # drop batch padding, restore (B, 1, L2) module layout
    return out[:B][:, None, :]


# ------------------------- pure-JAX reference (for validation) --------------
def reference_forward(x_ncl, params, cfg):
    slope = 0.01
    s_c, mp_k, mp_s = cfg['cnn_stride'], cfg['mp_kernel'], cfg['mp_stride']
    H = cfg['embedding_dim']

    y = jax.lax.conv_general_dilated(
        x_ncl, params['conv_w'], window_strides=(s_c,), padding='VALID',
        dimension_numbers=('NCH', 'OIH', 'NCH'))
    y = y + params['conv_b'][None, :, None]
    y = jnp.where(y >= 0, y, slope * y)
    y = jax.lax.reduce_window(y, -jnp.inf, jax.lax.max,
                              (1, 1, mp_k), (1, 1, mp_s), 'VALID')
    y = jnp.transpose(y, (0, 2, 1))          # (B, T, C)

    def lstm(xs, w_ih, w_hh, b, hs):
        B, T, _ = xs.shape
        h = jnp.zeros((B, hs)); c = jnp.zeros((B, hs))
        outs = []
        for t in range(T):
            g = xs[:, t] @ w_ih.T + h @ w_hh.T + b
            i = jax.nn.sigmoid(g[:, :hs]); f = jax.nn.sigmoid(g[:, hs:2 * hs])
            gg = jnp.tanh(g[:, 2 * hs:3 * hs]); o = jax.nn.sigmoid(g[:, 3 * hs:])
            c = f * c + i * gg
            h = o * jnp.tanh(c)
            outs.append(h)
        return jnp.stack(outs, axis=1)

    h1 = lstm(y, params['l1_w_ih'], params['l1_w_hh'],
              params['l1_b_ih'] + params['l1_b_hh'], H)
    x2 = h1 + h1
    h2f = lstm(x2, params['l2f_w_ih'], params['l2f_w_hh'],
               params['l2f_b_ih'] + params['l2f_b_hh'], 1)
    h2b = lstm(x2[:, ::-1], params['l2b_w_ih'], params['l2b_w_hh'],
               params['l2b_b_ih'] + params['l2b_b_hh'], 1)[:, ::-1]
    return (h2f[:, :, 0] + h2b[:, :, 0])[:, None, :]


if __name__ == "__main__":
    cfg = dict(input_dim=4, cnn_channels=8, cnn_kernel=3, cnn_stride=1,
               mp_kernel=2, mp_stride=2, embedding_dim=16)
    B, L = 2, 16
    Cin, Cout, K, H = cfg['input_dim'], cfg['cnn_channels'], cfg['cnn_kernel'], cfg['embedding_dim']

    key = jax.random.PRNGKey(0)
    ks = jax.random.split(key, 16)

    def rnd(k, shape, scale=0.2):
        return scale * jax.random.normal(k, shape, jnp.float32)

    params = dict(
        conv_w=rnd(ks[0], (Cout, Cin, K)),
        conv_b=rnd(ks[1], (Cout,)),
        l1_w_ih=rnd(ks[2], (4 * H, Cout)),
        l1_w_hh=rnd(ks[3], (4 * H, H)),
        l1_b_ih=rnd(ks[4], (4 * H,)),
        l1_b_hh=rnd(ks[5], (4 * H,)),
        l2f_w_ih=rnd(ks[6], (4, H)),
        l2f_w_hh=rnd(ks[7], (4, 1)),
        l2f_b_ih=rnd(ks[8], (4,)),
        l2f_b_hh=rnd(ks[9], (4,)),
        l2b_w_ih=rnd(ks[10], (4, H)),
        l2b_w_hh=rnd(ks[11], (4, 1)),
        l2b_b_ih=rnd(ks[12], (4,)),
        l2b_b_hh=rnd(ks[13], (4,)),
    )
    x = rnd(ks[14], (B, Cin, L), scale=1.0)      # PyTorch NCL input

    out = jax.block_until_ready(dtc_encoder_forward(x, params, cfg))
    ref = jax.block_until_ready(reference_forward(x, params, cfg))

    L1 = (L - K) // cfg['cnn_stride'] + 1
    L2 = (L1 - cfg['mp_kernel']) // cfg['mp_stride'] + 1
    assert out.shape == (B, 1, L2), out.shape
    if not jnp.allclose(out, ref, atol=2e-3, rtol=2e-3):
        raise AssertionError("Pallas kernel does not match reference")
    print("KERNEL_OK")
</pallas_src>

<mosaic_0001>
module attributes {stable_mosaic.version = 11 : i64} {
  func.func @dtc_kernel(%arg0: i32, %arg1: memref<2x56x12xf32, #tpu.memory_space<vmem>>, %arg2: memref<12x8xf32, #tpu.memory_space<vmem>>, %arg3: memref<1x8xf32, #tpu.memory_space<vmem>>, %arg4: memref<8x64xf32, #tpu.memory_space<vmem>>, %arg5: memref<16x64xf32, #tpu.memory_space<vmem>>, %arg6: memref<1x64xf32, #tpu.memory_space<vmem>>, %arg7: memref<16x8xf32, #tpu.memory_space<vmem>>, %arg8: memref<1x8xf32, #tpu.memory_space<vmem>>, %arg9: memref<1x8xf32, #tpu.memory_space<vmem>>, %arg10: memref<8x7xf32, #tpu.memory_space<vmem>>, %arg11: memref<56x64xf32, #tpu.memory_space<vmem>>, %arg12: memref<56x16xf32, #tpu.memory_space<vmem>>, %arg13: memref<56x8xf32, #tpu.memory_space<vmem>>) attributes {dimension_semantics = [#tpu.dimension_semantics<parallel>], iteration_bounds = array<i64: 1>, scalar_prefetch = 0 : i64, scratch_operands = 3 : i64, tpu.core_type = #tpu.core_type<tc>, window_params = [{transform_indices = @transform_0, window_bounds = array<i64: 2, 56, 12>}, {pipeline_mode = #tpu.pipeline_mode<synchronous>, transform_indices = @transform_1, window_bounds = array<i64: 12, 8>}, {pipeline_mode = #tpu.pipeline_mode<synchronous>, transform_indices = @transform_2, window_bounds = array<i64: 1, 8>}, {pipeline_mode = #tpu.pipeline_mode<synchronous>, transform_indices = @transform_3, window_bounds = array<i64: 8, 64>}, {pipeline_mode = #tpu.pipeline_mode<synchronous>, transform_indices = @transform_4, window_bounds = array<i64: 16, 64>}, {pipeline_mode = #tpu.pipeline_mode<synchronous>, transform_indices = @transform_5, window_bounds = array<i64: 1, 64>}, {pipeline_mode = #tpu.pipeline_mode<synchronous>, transform_indices = @transform_6, window_bounds = array<i64: 16, 8>}, {pipeline_mode = #tpu.pipeline_mode<synchronous>, transform_indices = @transform_7, window_bounds = array<i64: 1, 8>}, {pipeline_mode = #tpu.pipeline_mode<synchronous>, transform_indices = @transform_8, window_bounds = array<i64: 1, 8>}, {transform_indices = @transform_9, window_bounds = array<i64: 8, 7>}]} {
    %c0 = arith.constant 0 : index
    %c0_0 = arith.constant 0 : index
    %0 = vector.load %arg2[%c0, %c0_0] : memref<12x8xf32, #tpu.memory_space<vmem>>, vector<12x8xf32>
    %c0_1 = arith.constant 0 : index
    %c0_2 = arith.constant 0 : index
    %c0_3 = arith.constant 0 : index
    %1 = vector.load %arg1[%c0_1, %c0_2, %c0_3] : memref<2x56x12xf32, #tpu.memory_space<vmem>>, vector<1x56x12xf32>
    %2 = vector.shape_cast %1 : vector<1x56x12xf32> to vector<56x12xf32>
    %cst = arith.constant dense<0.000000e+00> : vector<56x8xf32>
    %3 = tpu.matmul %2, %0, %cst {dimension_numbers = #tpu.dot_dimension_numbers<[1], [0], [0], [1], [0, 0, 1, 1], [], []>} : vector<56x12xf32>, vector<12x8xf32>, vector<56x8xf32> -> vector<56x8xf32>
    %c1 = arith.constant 1 : index
    %c0_4 = arith.constant 0 : index
    %c0_5 = arith.constant 0 : index
    %4 = vector.load %arg1[%c1, %c0_4, %c0_5] : memref<2x56x12xf32, #tpu.memory_space<vmem>>, vector<1x56x12xf32>
    %5 = vector.shape_cast %4 : vector<1x56x12xf32> to vector<56x12xf32>
    %cst_6 = arith.constant dense<0.000000e+00> : vector<56x8xf32>
    %6 = tpu.matmul %5, %0, %cst_6 {dimension_numbers = #tpu.dot_dimension_numbers<[1], [0], [0], [1], [0, 0, 1, 1], [], []>} : vector<56x12xf32>, vector<12x8xf32>, vector<56x8xf32> -> vector<56x8xf32>
    %7 = arith.maximumf %3, %6 : vector<56x8xf32>
    %c0_7 = arith.constant 0 : index
    %c0_8 = arith.constant 0 : index
    %8 = vector.load %arg3[%c0_7, %c0_8] : memref<1x8xf32, #tpu.memory_space<vmem>>, vector<1x8xf32>
    %9 = vector.broadcast %8 : vector<1x8xf32> to vector<56x8xf32>
    %10 = arith.addf %7, %9 : vector<56x8xf32>
    %cst_9 = arith.constant 0.000000e+00 : f32
    %11 = vector.broadcast %cst_9 : f32 to vector<56x8xf32>
    %12 = arith.cmpf oge, %10, %11 : vector<56x8xf32>
    %cst_10 = arith.constant 0.00999999977 : f32
    %13 = vector.broadcast %cst_10 : f32 to vector<56x8xf32>
    %14 = arith.mulf %13, %10 : vector<56x8xf32>
    %15 = arith.select %12, %10, %14 : vector<56x8xi1>, vector<56x8xf32>
    %c0_11 = arith.constant 0 : index
    %c0_12 = arith.constant 0 : index
    %16 = vector.load %arg4[%c0_11, %c0_12] : memref<8x64xf32, #tpu.memory_space<vmem>>, vector<8x64xf32>
    %cst_13 = arith.constant dense<0.000000e+00> : vector<56x64xf32>
    %17 = tpu.matmul %15, %16, %cst_13 {dimension_numbers = #tpu.dot_dimension_numbers<[1], [0], [0], [1], [0, 0, 1, 1], [], []>} : vector<56x8xf32>, vector<8x64xf32>, vector<56x64xf32> -> vector<56x64xf32>
    %c0_14 = arith.constant 0 : index
    %c0_15 = arith.constant 0 : index
    %18 = vector.load %arg6[%c0_14, %c0_15] : memref<1x64xf32, #tpu.memory_space<vmem>>, vector<1x64xf32>
    %19 = vector.broadcast %18 : vector<1x64xf32> to vector<56x64xf32>
    %20 = arith.addf %17, %19 : vector<56x64xf32>
    %c0_16 = arith.constant 0 : index
    %c0_17 = arith.constant 0 : index
    %21 = vector.load %arg11[%c0_16, %c0_17] : memref<56x64xf32, #tpu.memory_space<vmem>>, vector<56x64xf32>
    tpu.vector_store %arg11[%c0_16, %c0_17], %20 {strides = array<i32>} : memref<56x64xf32, #tpu.memory_space<vmem>>, vector<56x64xf32>,
    %c0_18 = arith.constant 0 : index
    %c0_19 = arith.constant 0 : index
    %22 = vector.load %arg5[%c0_18, %c0_19] : memref<16x64xf32, #tpu.memory_space<vmem>>, vector<16x64xf32>
    %cst_20 = arith.constant 0.000000e+00 : f32
    %23 = vector.broadcast %cst_20 : f32 to vector<8x16xf32>
    %c0_i32 = arith.constant 0 : i32
    %c7_i32 = arith.constant 7 : i32
    %24 = arith.addi %c0_i32, %c7_i32 : i32
    %c1_i32 = arith.constant 1 : i32
    %25:2 = scf.for %arg14 = %c0_i32 to %24 step %c1_i32 iter_args(%arg15 = %23, %arg16 = %23) -> (vector<8x16xf32>, vector<8x16xf32>)  : i32 {
      %c8_i32 = arith.constant 8 : i32
      %46 = arith.muli %arg14, %c8_i32 : i32
      %47 = tpu.assume_multiple %46, 8 : i32
      %48 = vector.extract_strided_slice %arg15 {offsets = [0, 0], sizes = [8, 1], strides = [1, 1]} : vector<8x16xf32> to vector<8x1xf32>
      %49 = vector.extract_strided_slice %22 {offsets = [0, 0], sizes = [1, 64], strides = [1, 1]} : vector<16x64xf32> to vector<1x64xf32>
      %50 = vector.broadcast %48 : vector<8x1xf32> to vector<8x64xf32>
      %51 = vector.broadcast %49 : vector<1x64xf32> to vector<8x64xf32>
      %52 = arith.mulf %50, %51 : vector<8x64xf32>
      %53 = vector.extract_strided_slice %arg15 {offsets = [0, 1], sizes = [8, 1], strides = [1, 1]} : vector<8x16xf32> to vector<8x1xf32>
      %54 = vector.extract_strided_slice %22 {offsets = [1, 0], sizes = [1, 64], strides = [1, 1]} : vector<16x64xf32> to vector<1x64xf32>
      %55 = vector.broadcast %53 : vector<8x1xf32> to vector<8x64xf32>
      %56 = vector.broadcast %54 : vector<1x64xf32> to vector<8x64xf32>
      %57 = arith.mulf %55, %56 : vector<8x64xf32>
      %58 = vector.extract_strided_slice %arg15 {offsets = [0, 2], sizes = [8, 1], strides = [1, 1]} : vector<8x16xf32> to vector<8x1xf32>
      %59 = vector.extract_strided_slice %22 {offsets = [2, 0], sizes = [1, 64], strides = [1, 1]} : vector<16x64xf32> to vector<1x64xf32>
      %60 = vector.broadcast %58 : vector<8x1xf32> to vector<8x64xf32>
      %61 = vector.broadcast %59 : vector<1x64xf32> to vector<8x64xf32>
      %62 = arith.mulf %60, %61 : vector<8x64xf32>
      %63 = vector.extract_strided_slice %arg15 {offsets = [0, 3], sizes = [8, 1], strides = [1, 1]} : vector<8x16xf32> to vector<8x1xf32>
      %64 = vector.extract_strided_slice %22 {offsets = [3, 0], sizes = [1, 64], strides = [1, 1]} : vector<16x64xf32> to vector<1x64xf32>
      %65 = vector.broadcast %63 : vector<8x1xf32> to vector<8x64xf32>
      %66 = vector.broadcast %64 : vector<1x64xf32> to vector<8x64xf32>
      %67 = arith.mulf %65, %66 : vector<8x64xf32>
      %68 = vector.extract_strided_slice %arg15 {offsets = [0, 4], sizes = [8, 1], strides = [1, 1]} : vector<8x16xf32> to vector<8x1xf32>
      %69 = vector.extract_strided_slice %22 {offsets = [4, 0], sizes = [1, 64], strides = [1, 1]} : vector<16x64xf32> to vector<1x64xf32>
      %70 = vector.broadcast %68 : vector<8x1xf32> to vector<8x64xf32>
      %71 = vector.broadcast %69 : vector<1x64xf32> to vector<8x64xf32>
      %72 = arith.mulf %70, %71 : vector<8x64xf32>
      %73 = vector.extract_strided_slice %arg15 {offsets = [0, 5], sizes = [8, 1], strides = [1, 1]} : vector<8x16xf32> to vector<8x1xf32>
      %74 = vector.extract_strided_slice %22 {offsets = [5, 0], sizes = [1, 64], strides = [1, 1]} : vector<16x64xf32> to vector<1x64xf32>
      %75 = vector.broadcast %73 : vector<8x1xf32> to vector<8x64xf32>
      %76 = vector.broadcast %74 : vector<1x64xf32> to vector<8x64xf32>
      %77 = arith.mulf %75, %76 : vector<8x64xf32>
      %78 = vector.extract_strided_slice %arg15 {offsets = [0, 6], sizes = [8, 1], strides = [1, 1]} : vector<8x16xf32> to vector<8x1xf32>
      %79 = vector.extract_strided_slice %22 {offsets = [6, 0], sizes = [1, 64], strides = [1, 1]} : vector<16x64xf32> to vector<1x64xf32>
      %80 = vector.broadcast %78 : vector<8x1xf32> to vector<8x64xf32>
      %81 = vector.broadcast %79 : vector<1x64xf32> to vector<8x64xf32>
      %82 = arith.mulf %80, %81 : vector<8x64xf32>
      %83 = vector.extract_strided_slice %arg15 {offsets = [0, 7], sizes = [8, 1], strides = [1, 1]} : vector<8x16xf32> to vector<8x1xf32>
      %84 = vector.extract_strided_slice %22 {offsets = [7, 0], sizes = [1, 64], strides = [1, 1]} : vector<16x64xf32> to vector<1x64xf32>
      %85 = vector.broadcast %83 : vector<8x1xf32> to vector<8x64xf32>
      %86 = vector.broadcast %84 : vector<1x64xf32> to vector<8x64xf32>
      %87 = arith.mulf %85, %86 : vector<8x64xf32>
      %88 = vector.extract_strided_slice %arg15 {offsets = [0, 8], sizes = [8, 1], strides = [1, 1]} : vector<8x16xf32> to vector<8x1xf32>
      %89 = vector.extract_strided_slice %22 {offsets = [8, 0], sizes = [1, 64], strides = [1, 1]} : vector<16x64xf32> to vector<1x64xf32>
      %90 = vector.broadcast %88 : vector<8x1xf32> to vector<8x64xf32>
      %91 = vector.broadcast %89 : vector<1x64xf32> to vector<8x64xf32>
      %92 = arith.mulf %90, %91 : vector<8x64xf32>
      %93 = vector.extract_strided_slice %arg15 {offsets = [0, 9], sizes = [8, 1], strides = [1, 1]} : vector<8x16xf32> to vector<8x1xf32>
      %94 = vector.extract_strided_slice %22 {offsets = [9, 0], sizes = [1, 64], strides = [1, 1]} : vector<16x64xf32> to vector<1x64xf32>
      %95 = vector.broadcast %93 : vector<8x1xf32> to vector<8x64xf32>
      %96 = vector.broadcast %94 : vector<1x64xf32> to vector<8x64xf32>
      %97 = arith.mulf %95, %96 : vector<8x64xf32>
      %98 = vector.extract_strided_slice %arg15 {offsets = [0, 10], sizes = [8, 1], strides = [1, 1]} : vector<8x16xf32> to vector<8x1xf32>
      %99 = vector.extract_strided_slice %22 {offsets = [10, 0], sizes = [1, 64], strides = [1, 1]} : vector<16x64xf32> to vector<1x64xf32>
      %100 = vector.broadcast %98 : vector<8x1xf32> to vector<8x64xf32>
      %101 = vector.broadcast %99 : vector<1x64xf32> to vector<8x64xf32>
      %102 = arith.mulf %100, %101 : vector<8x64xf32>
      %103 = vector.extract_strided_slice %arg15 {offsets = [0, 11], sizes = [8, 1], strides = [1, 1]} : vector<8x16xf32> to vector<8x1xf32>
      %104 = vector.extract_strided_slice %22 {offsets = [11, 0], sizes = [1, 64], strides = [1, 1]} : vector<16x64xf32> to vector<1x64xf32>
      %105 = vector.broadcast %103 : vector<8x1xf32> to vector<8x64xf32>
      %106 = vector.broadcast %104 : vector<1x64xf32> to vector<8x64xf32>
      %107 = arith.mulf %105, %106 : vector<8x64xf32>
      %108 = vector.extract_strided_slice %arg15 {offsets = [0, 12], sizes = [8, 1], strides = [1, 1]} : vector<8x16xf32> to vector<8x1xf32>
      %109 = vector.extract_strided_slice %22 {offsets = [12, 0], sizes = [1, 64], strides = [1, 1]} : vector<16x64xf32> to vector<1x64xf32>
      %110 = vector.broadcast %108 : vector<8x1xf32> to vector<8x64xf32>
      %111 = vector.broadcast %109 : vector<1x64xf32> to vector<8x64xf32>
      %112 = arith.mulf %110, %111 : vector<8x64xf32>
      %113 = vector.extract_strided_slice %arg15 {offsets = [0, 13], sizes = [8, 1], strides = [1, 1]} : vector<8x16xf32> to vector<8x1xf32>
      %114 = vector.extract_strided_slice %22 {offsets = [13, 0], sizes = [1, 64], strides = [1, 1]} : vector<16x64xf32> to vector<1x64xf32>
      %115 = vector.broadcast %113 : vector<8x1xf32> to vector<8x64xf32>
      %116 = vector.broadcast %114 : vector<1x64xf32> to vector<8x64xf32>
      %117 = arith.mulf %115, %116 : vector<8x64xf32>
      %118 = vector.extract_strided_slice %arg15 {offsets = [0, 14], sizes = [8, 1], strides = [1, 1]} : vector<8x16xf32> to vector<8x1xf32>
      %119 = vector.extract_strided_slice %22 {offsets = [14, 0], sizes = [1, 64], strides = [1, 1]} : vector<16x64xf32> to vector<1x64xf32>
      %120 = vector.broadcast %118 : vector<8x1xf32> to vector<8x64xf32>
      %121 = vector.broadcast %119 : vector<1x64xf32> to vector<8x64xf32>
      %122 = arith.mulf %120, %121 : vector<8x64xf32>
      %123 = vector.extract_strided_slice %arg15 {offsets = [0, 15], sizes = [8, 1], strides = [1, 1]} : vector<8x16xf32> to vector<8x1xf32>
      %124 = vector.extract_strided_slice %22 {offsets = [15, 0], sizes = [1, 64], strides = [1, 1]} : vector<16x64xf32> to vector<1x64xf32>
      %125 = vector.broadcast %123 : vector<8x1xf32> to vector<8x64xf32>
      %126 = vector.broadcast %124 : vector<1x64xf32> to vector<8x64xf32>
      %127 = arith.mulf %125, %126 : vector<8x64xf32>
      %128 = arith.addf %52, %57 : vector<8x64xf32>
      %129 = arith.addf %62, %67 : vector<8x64xf32>
      %130 = arith.addf %72, %77 : vector<8x64xf32>
      %131 = arith.addf %82, %87 : vector<8x64xf32>
      %132 = arith.addf %92, %97 : vector<8x64xf32>
      %133 = arith.addf %102, %107 : vector<8x64xf32>
      %134 = arith.addf %112, %117 : vector<8x64xf32>
      %135 = arith.addf %122, %127 : vector<8x64xf32>
      %136 = arith.addf %128, %129 : vector<8x64xf32>
      %137 = arith.addf %130, %131 : vector<8x64xf32>
      %138 = arith.addf %132, %133 : vector<8x64xf32>
      %139 = arith.addf %134, %135 : vector<8x64xf32>
      %140 = arith.addf %136, %137 : vector<8x64xf32>
      %141 = arith.addf %138, %139 : vector<8x64xf32>
      %142 = arith.addf %140, %141 : vector<8x64xf32>
      %143 = arith.index_cast %47 : i32 to index
      %c0_43 = arith.constant 0 : index
      %144 = vector.load %arg11[%143, %c0_43] : memref<56x64xf32, #tpu.memory_space<vmem>>, vector<8x64xf32>
      %145 = arith.addf %144, %142 : vector<8x64xf32>
      %146 = vector.extract_strided_slice %145 {offsets = [0, 0], sizes = [8, 48], strides = [1, 1]} : vector<8x64xf32> to vector<8x48xf32>
      %147 = arith.negf %146 : vector<8x48xf32>
      %148 = math.exp %147 : vector<8x48xf32>
      %cst_44 = arith.constant 1.000000e+00 : f32
      %149 = vector.broadcast %cst_44 : f32 to vector<8x48xf32>
      %150 = arith.addf %149, %148 : vector<8x48xf32>
      %151 = arith.divf %149, %150 : vector<8x48xf32>
      %152 = vector.extract_strided_slice %145 {offsets = [0, 48], sizes = [8, 16], strides = [1, 1]} : vector<8x64xf32> to vector<8x16xf32>
      %153 = math.tanh %152 : vector<8x16xf32>
      %154 = vector.extract_strided_slice %151 {offsets = [0, 16], sizes = [8, 16], strides = [1, 1]} : vector<8x48xf32> to vector<8x16xf32>
      %155 = arith.mulf %154, %arg16 : vector<8x16xf32>
      %156 = vector.extract_strided_slice %151 {offsets = [0, 0], sizes = [8, 16], strides = [1, 1]} : vector<8x48xf32> to vector<8x16xf32>
      %157 = arith.mulf %156, %153 : vector<8x16xf32>
      %158 = arith.addf %155, %157 : vector<8x16xf32>
      %159 = vector.extract_strided_slice %151 {offsets = [0, 32], sizes = [8, 16], strides = [1, 1]} : vector<8x48xf32> to vector<8x16xf32>
      %160 = math.tanh %158 : vector<8x16xf32>
      %161 = arith.mulf %159, %160 : vector<8x16xf32>
      %162 = arith.index_cast %47 : i32 to index
      %c0_45 = arith.constant 0 : index
      %163 = vector.load %arg12[%162, %c0_45] : memref<56x16xf32, #tpu.memory_space<vmem>>, vector<8x16xf32>
      tpu.vector_store %arg12[%162, %c0_45], %161 {strides = array<i32>} : memref<56x16xf32, #tpu.memory_space<vmem>>, vector<8x16xf32>,
      scf.yield %161, %158 : vector<8x16xf32>, vector<8x16xf32>
    }
    %c7_i32_21 = arith.constant 7 : i32
    %c0_22 = arith.constant 0 : index
    %c0_23 = arith.constant 0 : index
    %26 = vector.load %arg12[%c0_22, %c0_23] : memref<56x16xf32, #tpu.memory_space<vmem>>, vector<56x16xf32>
    %c0_24 = arith.constant 0 : index
    %c0_25 = arith.constant 0 : index
    %27 = vector.load %arg7[%c0_24, %c0_25] : memref<16x8xf32, #tpu.memory_space<vmem>>, vector<16x8xf32>
    %cst_26 = arith.constant dense<0.000000e+00> : vector<56x8xf32>
    %28 = tpu.matmul %26, %27, %cst_26 {dimension_numbers = #tpu.dot_dimension_numbers<[1], [0], [0], [1], [0, 0, 1, 1], [], []>} : vector<56x16xf32>, vector<16x8xf32>, vector<56x8xf32> -> vector<56x8xf32>
    %c0_27 = arith.constant 0 : index
    %c0_28 = arith.constant 0 : index
    %29 = vector.load %arg8[%c0_27, %c0_28] : memref<1x8xf32, #tpu.memory_space<vmem>>, vector<1x8xf32>
    %30 = vector.broadcast %29 : vector<1x8xf32> to vector<56x8xf32>
    %31 = arith.addf %28, %30 : vector<56x8xf32>
    %c0_29 = arith.constant 0 : index
    %c0_30 = arith.constant 0 : index
    %32 = vector.load %arg13[%c0_29, %c0_30] : memref<56x8xf32, #tpu.memory_space<vmem>>, vector<56x8xf32>
    tpu.vector_store %arg13[%c0_29, %c0_30], %31 {strides = array<i32>} : memref<56x8xf32, #tpu.memory_space<vmem>>, vector<56x8xf32>,
    %c0_31 = arith.constant 0 : index
    %c0_32 = arith.constant 0 : index
    %33 = vector.load %arg9[%c0_31, %c0_32] : memref<1x8xf32, #tpu.memory_space<vmem>>, vector<1x8xf32>
    %34 = tpu.iota {dimensions = array<i32: 1>} : vector<1x8xi32>
    %c1_i32_33 = arith.constant 1 : i32
    %35 = vector.broadcast %c1_i32_33 : i32 to vector<1x8xi32>
    %36 = arith.andi %34, %35 : vector<1x8xi32>
    %c0_i32_34 = arith.constant 0 : i32
    %37 = vector.broadcast %c0_i32_34 : i32 to vector<1x8xi32>
    %38 = arith.cmpi eq, %36, %37 : vector<1x8xi32>
    %39 = tpu.iota {dimensions = array<i32: 1>} : vector<1x7xi32>
    %cst_35 = arith.constant 0.000000e+00 : f32
    %40 = vector.broadcast %cst_35 : f32 to vector<8x2xf32>
    %cst_36 = arith.constant 0.000000e+00 : f32
    %41 = vector.broadcast %cst_36 : f32 to vector<8x7xf32>
    %c0_i32_37 = arith.constant 0 : i32
    %c7_i32_38 = arith.constant 7 : i32
    %42 = arith.addi %c0_i32_37, %c7_i32_38 : i32
    %c1_i32_39 = arith.constant 1 : i32
    %43:4 = scf.for %arg14 = %c0_i32_37 to %42 step %c1_i32_39 iter_args(%arg15 = %40, %arg16 = %40, %arg17 = %41, %arg18 = %41) -> (vector<8x2xf32>, vector<8x2xf32>, vector<8x7xf32>, vector<8x7xf32>)  : i32 {
      %c6_i32 = arith.constant 6 : i32
      %46 = arith.subi %c6_i32, %arg14 : i32
      %c8_i32 = arith.constant 8 : i32
      %47 = arith.muli %arg14, %c8_i32 : i32
      %48 = tpu.assume_multiple %47, 8 : i32
      %49 = arith.index_cast %48 : i32 to index
      %c0_43 = arith.constant 0 : index
      %50 = vector.load %arg13[%49, %c0_43] : memref<56x8xf32, #tpu.memory_space<vmem>>, vector<8x8xf32>
      %c8_i32_44 = arith.constant 8 : i32
      %51 = arith.muli %46, %c8_i32_44 : i32
      %52 = tpu.assume_multiple %51, 8 : i32
      %53 = arith.index_cast %52 : i32 to index
      %c0_45 = arith.constant 0 : index
      %54 = vector.load %arg13[%53, %c0_45] : memref<56x8xf32, #tpu.memory_space<vmem>>, vector<8x8xf32>
      %55 = vector.shape_cast %38 : vector<1x8xi1> to vector<1x8xi1>
      %56 = vector.broadcast %55 : vector<1x8xi1> to vector<8x8xi1>
      %57 = arith.select %56, %50, %54 : vector<8x8xi1>, vector<8x8xf32>
      %58 = tpu.concatenate %arg15, %arg15, %arg15, %arg15 in 1 : vector<8x2xf32>, vector<8x2xf32>, vector<8x2xf32>, vector<8x2xf32> -> vector<8x8xf32>
      %59 = vector.broadcast %33 : vector<1x8xf32> to vector<8x8xf32>
      %60 = arith.mulf %58, %59 : vector<8x8xf32>
      %61 = arith.addf %57, %60 : vector<8x8xf32>
      %62 = vector.extract_strided_slice %61 {offsets = [0, 0], sizes = [8, 6], strides = [1, 1]} : vector<8x8xf32> to vector<8x6xf32>
      %63 = arith.negf %62 : vector<8x6xf32>
      %64 = math.exp %63 : vector<8x6xf32>
      %cst_46 = arith.constant 1.000000e+00 : f32
      %65 = vector.broadcast %cst_46 : f32 to vector<8x6xf32>
      %66 = arith.addf %65, %64 : vector<8x6xf32>
      %67 = arith.divf %65, %66 : vector<8x6xf32>
      %68 = vector.extract_strided_slice %61 {offsets = [0, 6], sizes = [8, 2], strides = [1, 1]} : vector<8x8xf32> to vector<8x2xf32>
      %69 = math.tanh %68 : vector<8x2xf32>
      %70 = vector.extract_strided_slice %67 {offsets = [0, 2], sizes = [8, 2], strides = [1, 1]} : vector<8x6xf32> to vector<8x2xf32>
      %71 = arith.mulf %70, %arg16 : vector<8x2xf32>
      %72 = vector.extract_strided_slice %67 {offsets = [0, 0], sizes = [8, 2], strides = [1, 1]} : vector<8x6xf32> to vector<8x2xf32>
      %73 = arith.mulf %72, %69 : vector<8x2xf32>
      %74 = arith.addf %71, %73 : vector<8x2xf32>
      %75 = vector.extract_strided_slice %67 {offsets = [0, 4], sizes = [8, 2], strides = [1, 1]} : vector<8x6xf32> to vector<8x2xf32>
      %76 = math.tanh %74 : vector<8x2xf32>
      %77 = arith.mulf %75, %76 : vector<8x2xf32>
      %78 = vector.broadcast %arg14 : i32 to vector<1x7xi32>
      %79 = arith.cmpi eq, %39, %78 : vector<1x7xi32>
      %80 = vector.extract_strided_slice %77 {offsets = [0, 0], sizes = [8, 1], strides = [1, 1]} : vector<8x2xf32> to vector<8x1xf32>
      %81 = vector.shape_cast %79 : vector<1x7xi1> to vector<1x7xi1>
      %82 = vector.broadcast %81 : vector<1x7xi1> to vector<8x7xi1>
      %83 = vector.shape_cast %80 : vector<8x1xf32> to vector<8x1xf32>
      %84 = vector.broadcast %83 : vector<8x1xf32> to vector<8x7xf32>
      %85 = arith.select %82, %84, %arg17 : vector<8x7xi1>, vector<8x7xf32>
      %86 = vector.broadcast %46 : i32 to vector<1x7xi32>
      %87 = arith.cmpi eq, %39, %86 : vector<1x7xi32>
      %88 = vector.extract_strided_slice %77 {offsets = [0, 1], sizes = [8, 1], strides = [1, 1]} : vector<8x2xf32> to vector<8x1xf32>
      %89 = vector.shape_cast %87 : vector<1x7xi1> to vector<1x7xi1>
      %90 = vector.broadcast %89 : vector<1x7xi1> to vector<8x7xi1>
      %91 = vector.shape_cast %88 : vector<8x1xf32> to vector<8x1xf32>
      %92 = vector.broadcast %91 : vector<8x1xf32> to vector<8x7xf32>
      %93 = arith.select %90, %92, %arg18 : vector<8x7xi1>, vector<8x7xf32>
      scf.yield %77, %74, %85, %93 : vector<8x2xf32>, vector<8x2xf32>, vector<8x7xf32>, vector<8x7xf32>
    }
    %c7_i32_40 = arith.constant 7 : i32
    %44 = arith.addf %43#2, %43#3 : vector<8x7xf32>
    %c0_41 = arith.constant 0 : index
    %c0_42 = arith.constant 0 : index
    %45 = vector.load %arg10[%c0_41, %c0_42] : memref<8x7xf32, #tpu.memory_space<vmem>>, vector<8x7xf32>
    tpu.vector_store %arg10[%c0_41, %c0_42], %44 {strides = array<i32>} : memref<8x7xf32, #tpu.memory_space<vmem>>, vector<8x7xf32>,
    return
  }
  func.func @transform_0(%arg0: i32) -> (i32, i32, i32) {
    %c0_i32 = arith.constant 0 : i32
    %c0_i32_0 = arith.constant 0 : i32
    %c0_i32_1 = arith.constant 0 : i32
    return %c0_i32, %arg0, %c0_i32_0 : i32, i32, i32
  }
  func.func @transform_1(%arg0: i32) -> (i32, i32) {
    %c0_i32 = arith.constant 0 : i32
    %c0_i32_0 = arith.constant 0 : i32
    %c0_i32_1 = arith.constant 0 : i32
    return %c0_i32, %c0_i32_0 : i32, i32
  }
  func.func @transform_2(%arg0: i32) -> (i32, i32) {
    %c0_i32 = arith.constant 0 : i32
    %c0_i32_0 = arith.constant 0 : i32
    %c0_i32_1 = arith.constant 0 : i32
    return %c0_i32, %c0_i32_0 : i32, i32
  }
  func.func @transform_3(%arg0: i32) -> (i32, i32) {
    %c0_i32 = arith.constant 0 : i32
    %c0_i32_0 = arith.constant 0 : i32
    %c0_i32_1 = arith.constant 0 : i32
    return %c0_i32, %c0_i32_0 : i32, i32
  }
  func.func @transform_4(%arg0: i32) -> (i32, i32) {
    %c0_i32 = arith.constant 0 : i32
    %c0_i32_0 = arith.constant 0 : i32
    %c0_i32_1 = arith.constant 0 : i32
    return %c0_i32, %c0_i32_0 : i32, i32
  }
  func.func @transform_5(%arg0: i32) -> (i32, i32) {
    %c0_i32 = arith.constant 0 : i32
    %c0_i32_0 = arith.constant 0 : i32
    %c0_i32_1 = arith.constant 0 : i32
    return %c0_i32, %c0_i32_0 : i32, i32
  }
  func.func @transform_6(%arg0: i32) -> (i32, i32) {
    %c0_i32 = arith.constant 0 : i32
    %c0_i32_0 = arith.constant 0 : i32
    %c0_i32_1 = arith.constant 0 : i32
    return %c0_i32, %c0_i32_0 : i32, i32
  }
  func.func @transform_7(%arg0: i32) -> (i32, i32) {
    %c0_i32 = arith.constant 0 : i32
    %c0_i32_0 = arith.constant 0 : i32
    %c0_i32_1 = arith.constant 0 : i32
    return %c0_i32, %c0_i32_0 : i32, i32
  }
  func.func @transform_8(%arg0: i32) -> (i32, i32) {
    %c0_i32 = arith.constant 0 : i32
    %c0_i32_0 = arith.constant 0 : i32
    %c0_i32_1 = arith.constant 0 : i32
    return %c0_i32, %c0_i32_0 : i32, i32
  }
  func.func @transform_9(%arg0: i32) -> (i32, i32) {
    %c0_i32 = arith.constant 0 : i32
    %c0_i32_0 = arith.constant 0 : i32
    return %arg0, %c0_i32 : i32, i32
  }
}

</mosaic_0001>

<llo_original>
// kernel: tpu_custom_call.1
$region0: #{tpu_custom_call.1}
  #allocation0 [shape = 'u32[]', space=smem, size = 0x4, offset = 0x4, fixed_abs, tag = 'smem constant byte address 0x4 - core index']
  #allocation1 [shape = 'u32[144,128]{1,0:T(1,128)}', space=vmem, size = 0x12000, scoped, tag = 'internal scratch']
  #allocation2 [shape = 'f32[56,64]{1,0:T(8,128)}', space=vmem, size = 0x7000, scoped, tag = 'scratch operand']
  #allocation3 [shape = 'f32[56,16]{1,0:T(8,128)}', space=vmem, size = 0x7000, scoped, tag = 'scratch operand']
  #allocation4 [shape = 'f32[56,8]{1,0:T(8,128)}', space=vmem, size = 0x7000, scoped, tag = 'scratch operand']
  %s0 = inlined_call_operand.vmem [shape: f32[2,56,12], index: 0, kind: input, shape index: {}]
  %s1 = inlined_call_operand.vmem [shape: f32[12,8], index: 1, kind: input, shape index: {}]
  %s2 = inlined_call_operand.vmem [shape: f32[1,8], index: 2, kind: input, shape index: {}]
  %s3 = inlined_call_operand.vmem [shape: f32[8,64], index: 3, kind: input, shape index: {}]
  %s4 = inlined_call_operand.vmem [shape: f32[16,64], index: 4, kind: input, shape index: {}]
  %s5 = inlined_call_operand.vmem [shape: f32[1,64], index: 5, kind: input, shape index: {}]
  %s6 = inlined_call_operand.vmem [shape: f32[16,8], index: 6, kind: input, shape index: {}]
  %s7 = inlined_call_operand.vmem [shape: f32[1,8], index: 7, kind: input, shape index: {}]
  %s8 = inlined_call_operand.vmem [shape: f32[1,8], index: 8, kind: input, shape index: {}]
  %s9 = inlined_call_operand.hbm [shape: f32[8,7], index: 9, kind: output, shape index: {}]
  %s10 = sld [smem:[#allocation0]]
  $region60: #{tpu_custom_call.1} parent=0
    _
  %s12 = ssub.s32 1, %s10
  %s13 = scalar_select 0, %s12, %s10
  $region1: #{tpu_custom_call.1} parent=0
    #allocation5 [shape = 'u8[4096]{0}', space=vmem, size = 0x1000, scoped, tag = 'output window, operand 0, single buffered']
    #allocation6 [shape = 's32[1]{0}', space=sflag, size = 0x4, scoped, tag = 'scoped memory for tpu_custom_call.1']
    %14 = vsyncpa [#allocation6], 0
    // Predicated region
    $region2: #{tpu_custom_call.1} parent=1 // pred_check
      _
    $region3: #{tpu_custom_call.1} parent=1 // pred_check_branch
      %16 = sbr.rel (0) target = $region5
    $region4: #{tpu_custom_call.1} parent=1 // pred_region
      _
    $region5: #{tpu_custom_call.1} parent=1 // pred_fallthru
      _
    // Predicated region
    $region6: #{tpu_custom_call.1} parent=1 // pred_check
      _
    $region7: #{tpu_custom_call.1} parent=1 // pred_check_branch
      %18 = sbr.rel (0) target = $region9
    $region8: #{tpu_custom_call.1} parent=1 // pred_region
      _
    $region9: #{tpu_custom_call.1} parent=1 // pred_fallthru
      _
    // Predicated region
    $region10: #{tpu_custom_call.1} parent=1 // pred_check
      _
    $region11: #{tpu_custom_call.1} parent=1 // pred_check_branch
      %20 = sbr.rel (0) target = $region13
    $region12: #{tpu_custom_call.1} parent=1 // pred_region
      _
    $region13: #{tpu_custom_call.1} parent=1 // pred_fallthru
      _
    // Predicated region
    $region14: #{tpu_custom_call.1} parent=1 // pred_check
      _
    $region15: #{tpu_custom_call.1} parent=1 // pred_check_branch
      %22 = sbr.rel (0) target = $region17
    $region16: #{tpu_custom_call.1} parent=1 // pred_region
      _
    $region17: #{tpu_custom_call.1} parent=1 // pred_fallthru
      _
    // Predicated region
    $region18: #{tpu_custom_call.1} parent=1 // pred_check
      _
    $region19: #{tpu_custom_call.1} parent=1 // pred_check_branch
      %24 = sbr.rel (0) target = $region21
    $region20: #{tpu_custom_call.1} parent=1 // pred_region
      _
    $region21: #{tpu_custom_call.1} parent=1 // pred_fallthru
      _
    // Predicated region
    $region22: #{tpu_custom_call.1} parent=1 // pred_check
      _
    $region23: #{tpu_custom_call.1} parent=1 // pred_check_branch
      %26 = sbr.rel (0) target = $region25
    $region24: #{tpu_custom_call.1} parent=1 // pred_region
      _
    $region25: #{tpu_custom_call.1} parent=1 // pred_fallthru
      _
    // Predicated region
    $region26: #{tpu_custom_call.1} parent=1 // pred_check
      _
    $region27: #{tpu_custom_call.1} parent=1 // pred_check_branch
      %28 = sbr.rel (0) target = $region29
    $region28: #{tpu_custom_call.1} parent=1 // pred_region
      _
    $region29: #{tpu_custom_call.1} parent=1 // pred_fallthru
      _
    // Predicated region
    $region30: #{tpu_custom_call.1} parent=1 // pred_check
      _
    $region31: #{tpu_custom_call.1} parent=1 // pred_check_branch
      %30 = sbr.rel (0) target = $region33
    $region32: #{tpu_custom_call.1} parent=1 // pred_region
      _
    $region33: #{tpu_custom_call.1} parent=1 // pred_fallthru
      _
    // Predicated region
    $region34: #{tpu_custom_call.1} parent=1 // pred_check
      _
    $region35: #{tpu_custom_call.1} parent=1 // pred_check_branch
      %32 = sbr.rel (0) target = $region37
    $region36: #{tpu_custom_call.1} parent=1 // pred_region
      _
    $region37: #{tpu_custom_call.1} parent=1 // pred_fallthru
      _
    %v33 = vld [vmem:[%s1] sm:$0xff]
    %v34 = vld [vmem:[%s1 + $0x8] sm:$0xf]
    %v35 = vld [vmem:[%s0] sm:$0xff]
    %v36 = vld [vmem:[%s0 + $0x8] sm:$0xff]
    %v37 = vld [vmem:[%s0 + $0x10] sm:$0xff]
    %v38 = vld [vmem:[%s0 + $0x18] sm:$0xff]
    %v39 = vld [vmem:[%s0 + $0x20] sm:$0xff]
    %v40 = vld [vmem:[%s0 + $0x28] sm:$0xff]
    %v41 = vld [vmem:[%s0 + $0x30] sm:$0xff]
    %vm42 = vcmask 97280
    %v44 = vsel %vm42, %v35, 0
    %v47 = vsel %vm42, %v36, 0
    %v50 = vsel %vm42, %v37, 0
    %v53 = vsel %vm42, %v38, 0
    %v56 = vsel %vm42, %v39, 0
    %v59 = vsel %vm42, %v40, 0
    %v62 = vsel %vm42, %v41, 0
    %vm64 = vcmask 1043456
    %v66 = vsel %vm64, %v34, 0
    %68 = vmatprep.subr.mxu0 0.0
    %69 = vmatpush1.msra.mxu0 %v33
    %70 = vmatprep.subr.mxu0 0.0
    %71 = vmatpush1.msra.mxu0 %v66
    %72 = vmatprep.subr.mxu0 0.0
    %73 = vmatpush1.msra.mxu0 0.0
    %74 = vmatprep.subr.mxu0 0.0
    %75 = vmatpush1.msra.mxu0 0.0
    %76 = vmatprep.subr.mxu0 0.0
    %77 = vmatpush1.msra.mxu0 0.0
    %78 = vmatprep.subr.mxu0 0.0
    %79 = vmatpush1.msra.mxu0 0.0
    %80 = vmatprep.subr.mxu0 0.0
    %81 = vmatpush1.msra.mxu0 0.0
    %82 = vmatprep.subr.mxu0 0.0
    %83 = vmatpush1.msra.mxu0 0.0
    %84 = vmatprep.subr.mxu0 0.0
    %85 = vmatpush1.msra.mxu0 0.0
    %86 = vmatprep.subr.mxu0 0.0
    %87 = vmatpush1.msra.mxu0 0.0
    %88 = vmatprep.subr.mxu0 0.0
    %89 = vmatpush1.msra.mxu0 0.0
    %90 = vmatprep.subr.mxu0 0.0
    %91 = vmatpush1.msra.mxu0 0.0
    %92 = vmatprep.subr.mxu0 0.0
    %93 = vmatpush1.msra.mxu0 0.0
    %94 = vmatprep.subr.mxu0 0.0
    %95 = vmatpush1.msra.mxu0 0.0
    %96 = vmatprep.subr.mxu0 0.0
    %97 = vmatpush1.msra.mxu0 0.0
    %98 = vmatprep.subr.mxu0 0.0
    %99 = vmatpush1.msra.mxu0 0.0
    %100 = vmatprep.subr.mxu0 0.0
    %101 = vmatpush1.msra.mxu0 0.0
    %102 = vmatprep.subr.mxu0 0.0
    %103 = vmatpush1.msra.mxu0 0.0
    %104 = vmatprep.subr.mxu0 0.0
    %105 = vmatpush1.msra.mxu0 0.0
    %106 = vmatprep.subr.mxu0 0.0
    %107 = vmatpush1.msra.mxu0 0.0
    %108 = vmatprep.subr.mxu0 0.0
    %109 = vmatpush1.msra.mxu0 0.0
    %110 = vmatprep.subr.mxu0 0.0
    %111 = vmatpush1.msra.mxu0 0.0
    %112 = vmatprep.subr.mxu0 0.0
    %113 = vmatpush1.msra.mxu0 0.0
    %114 = vmatprep.subr.mxu0 0.0
    %115 = vmatpush1.msra.mxu0 0.0
    %116 = vmatprep.subr.mxu0 0.0
    %117 = vmatpush1.msra.mxu0 0.0
    %118 = vmatprep.subr.mxu0 0.0
    %119 = vmatpush1.msra.mxu0 0.0
    %120 = vmatprep.subr.mxu0 0.0
    %121 = vmatpush1.msra.mxu0 0.0
    %122 = vmatprep.subr.mxu0 0.0
    %123 = vmatpush1.msra.mxu0 0.0
    %124 = vmatprep.subr.mxu0 0.0
    %125 = vmatpush1.msra.mxu0 0.0
    %126 = vmatprep.subr.mxu0 0.0
    %127 = vmatpush1.msra.mxu0 0.0
    %128 = vmatprep.subr.mxu0 0.0
    %129 = vmatpush1.msra.mxu0 0.0
    %130 = vmatprep.subr.mxu0 0.0
    %131 = vmatpush1.msra.mxu0 0.0
    %132 = vmatprep.mubr.f32.mxu0 0.0
    %133 = vmatmul.mubr.f32.gmra.mrb[0].mxu0 %v44
    %v134 = vpop.f32.mrb[0].mxu0
    %v135 = vadd.f32 0.0, %v134
    %v136 = vpop.f32.mrb[0].mxu0
    %137 = vmatprep.mubr.f32.mxu0 0.0
    %138 = vmatmul.mubr.f32.gmra.mrb[0].mxu0 %v47
    %v139 = vpop.f32.mrb[0].mxu0
    %v140 = vadd.f32 0.0, %v139
    %v141 = vpop.f32.mrb[0].mxu0
    %142 = vmatprep.mubr.f32.mxu0 0.0
    %143 = vmatmul.mubr.f32.gmra.mrb[0].mxu0 %v50
    %v144 = vpop.f32.mrb[0].mxu0
    %v145 = vadd.f32 0.0, %v144
    %v146 = vpop.f32.mrb[0].mxu0
    %147 = vmatprep.mubr.f32.mxu0 0.0
    %148 = vmatmul.mubr.f32.gmra.mrb[0].mxu0 %v53
    %v149 = vpop.f32.mrb[0].mxu0
    %v150 = vadd.f32 0.0, %v149
    %v151 = vpop.f32.mrb[0].mxu0
    %152 = vmatprep.mubr.f32.mxu0 0.0
    %153 = vmatmul.mubr.f32.gmra.mrb[0].mxu0 %v56
    %v154 = vpop.f32.mrb[0].mxu0
    %v155 = vadd.f32 0.0, %v154
    %v156 = vpop.f32.mrb[0].mxu0
    %157 = vmatprep.mubr.f32.mxu0 0.0
    %158 = vmatmul.mubr.f32.gmra.mrb[0].mxu0 %v59
    %v159 = vpop.f32.mrb[0].mxu0
    %v160 = vadd.f32 0.0, %v159
    %v161 = vpop.f32.mrb[0].mxu0
    %162 = vmatprep.mubr.f32.mxu0 0.0
    %163 = vmatmul.mubr.f32.gmra.mrb[0].mxu0 %v62
    %v164 = vpop.f32.mrb[0].mxu0
    %v165 = vadd.f32 0.0, %v164
    %v166 = vpop.f32.mrb[0].mxu0
    %167 = vdwg.mxu0
    %s168 = scalar_lea.vmem %s0, 56
    %v169 = vld [vmem:[%s168] sm:$0xff]
    %v170 = vld [vmem:[%s168 + $0x8] sm:$0xff]
    %v171 = vld [vmem:[%s168 + $0x10] sm:$0xff]
    %v172 = vld [vmem:[%s168 + $0x18] sm:$0xff]
    %v173 = vld [vmem:[%s168 + $0x20] sm:$0xff]
    %v174 = vld [vmem:[%s168 + $0x28] sm:$0xff]
    %v175 = vld [vmem:[%s168 + $0x30] sm:$0xff]
    %v177 = vsel %vm42, %v169, 0
    %v180 = vsel %vm42, %v170, 0
    %v183 = vsel %vm42, %v171, 0
    %v186 = vsel %vm42, %v172, 0
    %v189 = vsel %vm42, %v173, 0
    %v192 = vsel %vm42, %v174, 0
    %v195 = vsel %vm42, %v175, 0
    %197 = vmatprep.subr.mxu0 0.0
    %198 = vmatpush1.msra.mxu0 %v33
    %199 = vmatprep.subr.mxu0 0.0
    %200 = vmatpush1.msra.mxu0 %v66
    %201 = vmatprep.subr.mxu0 0.0
    %202 = vmatpush1.msra.mxu0 0.0
    %203 = vmatprep.subr.mxu0 0.0
    %204 = vmatpush1.msra.mxu0 0.0
    %205 = vmatprep.subr.mxu0 0.0
    %206 = vmatpush1.msra.mxu0 0.0
    %207 = vmatprep.subr.mxu0 0.0
    %208 = vmatpush1.msra.mxu0 0.0
    %209 = vmatprep.subr.mxu0 0.0
    %210 = vmatpush1.msra.mxu0 0.0
    %211 = vmatprep.subr.mxu0 0.0
    %212 = vmatpush1.msra.mxu0 0.0
    %213 = vmatprep.subr.mxu0 0.0
    %214 = vmatpush1.msra.mxu0 0.0
    %215 = vmatprep.subr.mxu0 0.0
    %216 = vmatpush1.msra.mxu0 0.0
    %217 = vmatprep.subr.mxu0 0.0
    %218 = vmatpush1.msra.mxu0 0.0
    %219 = vmatprep.subr.mxu0 0.0
    %220 = vmatpush1.msra.mxu0 0.0
    %221 = vmatprep.subr.mxu0 0.0
    %222 = vmatpush1.msra.mxu0 0.0
    %223 = vmatprep.subr.mxu0 0.0
    %224 = vmatpush1.msra.mxu0 0.0
    %225 = vmatprep.subr.mxu0 0.0
    %226 = vmatpush1.msra.mxu0 0.0
    %227 = vmatprep.subr.mxu0 0.0
    %228 = vmatpush1.msra.mxu0 0.0
    %229 = vmatprep.subr.mxu0 0.0
    %230 = vmatpush1.msra.mxu0 0.0
    %231 = vmatprep.subr.mxu0 0.0
    %232 = vmatpush1.msra.mxu0 0.0
    %233 = vmatprep.subr.mxu0 0.0
    %234 = vmatpush1.msra.mxu0 0.0
    %235 = vmatprep.subr.mxu0 0.0
    %236 = vmatpush1.msra.mxu0 0.0
    %237 = vmatprep.subr.mxu0 0.0
    %238 = vmatpush1.msra.mxu0 0.0
    %239 = vmatprep.subr.mxu0 0.0
    %240 = vmatpush1.msra.mxu0 0.0
    %241 = vmatprep.subr.mxu0 0.0
    %242 = vmatpush1.msra.mxu0 0.0
    %243 = vmatprep.subr.mxu0 0.0
    %244 = vmatpush1.msra.mxu0 0.0
    %245 = vmatprep.subr.mxu0 0.0
    %246 = vmatpush1.msra.mxu0 0.0
    %247 = vmatprep.subr.mxu0 0.0
    %248 = vmatpush1.msra.mxu0 0.0
    %249 = vmatprep.subr.mxu0 0.0
    %250 = vmatpush1.msra.mxu0 0.0
    %251 = vmatprep.subr.mxu0 0.0
    %252 = vmatpush1.msra.mxu0 0.0
    %253 = vmatprep.subr.mxu0 0.0
    %254 = vmatpush1.msra.mxu0 0.0
    %255 = vmatprep.subr.mxu0 0.0
    %256 = vmatpush1.msra.mxu0 0.0
    %257 = vmatprep.subr.mxu0 0.0
    %258 = vmatpush1.msra.mxu0 0.0
    %259 = vmatprep.subr.mxu0 0.0
    %260 = vmatpush1.msra.mxu0 0.0
    %261 = vmatprep.mubr.f32.mxu0 0.0
    %262 = vmatmul.mubr.f32.gmra.mrb[0].mxu0 %v177
    %v263 = vpop.f32.mrb[0].mxu0
    %v264 = vadd.f32 0.0, %v263
    %v265 = vpop.f32.mrb[0].mxu0
    %266 = vmatprep.mubr.f32.mxu0 0.0
    %267 = vmatmul.mubr.f32.gmra.mrb[0].mxu0 %v180
    %v268 = vpop.f32.mrb[0].mxu0
    %v269 = vadd.f32 0.0, %v268
    %v270 = vpop.f32.mrb[0].mxu0
    %271 = vmatprep.mubr.f32.mxu0 0.0
    %272 = vmatmul.mubr.f32.gmra.mrb[0].mxu0 %v183
    %v273 = vpop.f32.mrb[0].mxu0
    %v274 = vadd.f32 0.0, %v273
    %v275 = vpop.f32.mrb[0].mxu0
    %276 = vmatprep.mubr.f32.mxu0 0.0
    %277 = vmatmul.mubr.f32.gmra.mrb[0].mxu0 %v186
    %v278 = vpop.f32.mrb[0].mxu0
    %v279 = vadd.f32 0.0, %v278
    %v280 = vpop.f32.mrb[0].mxu0
    %281 = vmatprep.mubr.f32.mxu0 0.0
    %282 = vmatmul.mubr.f32.gmra.mrb[0].mxu0 %v189
    %v283 = vpop.f32.mrb[0].mxu0
    %v284 = vadd.f32 0.0, %v283
    %v285 = vpop.f32.mrb[0].mxu0
    %286 = vmatprep.mubr.f32.mxu0 0.0
    %287 = vmatmul.mubr.f32.gmra.mrb[0].mxu0 %v192
    %v288 = vpop.f32.mrb[0].mxu0
    %v289 = vadd.f32 0.0, %v288
    %v290 = vpop.f32.mrb[0].mxu0
    %291 = vmatprep.mubr.f32.mxu0 0.0
    %292 = vmatmul.mubr.f32.gmra.mrb[0].mxu0 %v195
    %v293 = vpop.f32.mrb[0].mxu0
    %v294 = vadd.f32 0.0, %v293
    %v295 = vpop.f32.mrb[0].mxu0
    %296 = vdwg.mxu0
    %v297 = vmax.f32 %v135, %v264
    %v298 = vmax.f32 %v140, %v269
    %v299 = vmax.f32 %v145, %v274
    %v300 = vmax.f32 %v150, %v279
    %v301 = vmax.f32 %v155, %v284
    %v302 = vmax.f32 %v160, %v289
    %v303 = vmax.f32 %v165, %v294
    %v304 = vld [vmem:[%s2] sm:$0x1]
    %v306 = vlaneseq
    %v307 = vshrl.u32 %v306, 7
    %v308 = vsub.s32 0, %v307
    %v309 = vrot.slane %v304, %v308
    %v311 = vadd.f32 %v297, %v309
    %v312 = vadd.f32 %v298, %v309
    %v313 = vadd.f32 %v299, %v309
    %v314 = vadd.f32 %v300, %v309
    %v315 = vadd.f32 %v301, %v309
    %v316 = vadd.f32 %v302, %v309
    %v317 = vadd.f32 %v303, %v309
    %vm318 = vcmp.ge.f32.partialorder %v311, 0.0
    %vm319 = vcmp.ge.f32.partialorder %v312, 0.0
    %vm320 = vcmp.ge.f32.partialorder %v313, 0.0
    %vm321 = vcmp.ge.f32.partialorder %v314, 0.0
    %vm322 = vcmp.ge.f32.partialorder %v315, 0.0
    %vm323 = vcmp.ge.f32.partialorder %v316, 0.0
    %vm324 = vcmp.ge.f32.partialorder %v317, 0.0
    %v325 = vmul.f32 %v311, 0.01
    %v326 = vmul.f32 %v312, 0.01
    %v327 = vmul.f32 %v313, 0.01
    %v328 = vmul.f32 %v314, 0.01
    %v329 = vmul.f32 %v315, 0.01
    %v330 = vmul.f32 %v316, 0.01
    %v331 = vmul.f32 %v317, 0.01
    %v332 = vsel %vm318, %v311, %v325
    %v333 = vsel %vm319, %v312, %v326
    %v334 = vsel %vm320, %v313, %v327
    %v335 = vsel %vm321, %v314, %v328
    %v336 = vsel %vm322, %v315, %v329
    %v337 = vsel %vm323, %v316, %v330
    %v338 = vsel %vm324, %v317, %v331
    %v339 = vld [vmem:[%s3] sm:$0xff]
    %v340 = vld [vmem:[%s5] sm:$0x1]
    %v342 = vlaneseq
    %v343 = vshrl.u32 %v342, 7
    %v344 = vsub.s32 0, %v343
    %v345 = vrot.slane %v340, %v344
    %vm347 = vcmask 64512
    %v349 = vsel %vm347, %v332, 0
    %v352 = vsel %vm347, %v333, 0
    %v355 = vsel %vm347, %v334, 0
    %v358 = vsel %vm347, %v335, 0
    %v361 = vsel %vm347, %v336, 0
    %v364 = vsel %vm347, %v337, 0
    %v367 = vsel %vm347, %v338, 0
    %369 = vmatprep.subr.mxu0 0.0
    %370 = vmatpush1.msra.mxu0 %v339
    %371 = vmatprep.subr.mxu0 0.0
    %372 = vmatpush1.msra.mxu0 0.0
    %373 = vmatprep.subr.mxu0 0.0
    %374 = vmatpush1.msra.mxu0 0.0
    %375 = vmatprep.subr.mxu0 0.0
    %376 = vmatpush1.msra.mxu0 0.0
    %377 = vmatprep.subr.mxu0 0.0
    %378 = vmatpush1.msra.mxu0 0.0
    %379 = vmatprep.subr.mxu0 0.0
    %380 = vmatpush1.msra.mxu0 0.0
    %381 = vmatprep.subr.mxu0 0.0
    %382 = vmatpush1.msra.mxu0 0.0
    %383 = vmatprep.subr.mxu0 0.0
    %384 = vmatpush1.msra.mxu0 0.0
    %385 = vmatprep.subr.mxu0 0.0
    %386 = vmatpush1.msra.mxu0 0.0
    %387 = vmatprep.subr.mxu0 0.0
    %388 = vmatpush1.msra.mxu0 0.0
    %389 = vmatprep.subr.mxu0 0.0
    %390 = vmatpush1.msra.mxu0 0.0
    %391 = vmatprep.subr.mxu0 0.0
    %392 = vmatpush1.msra.mxu0 0.0
    %393 = vmatprep.subr.mxu0 0.0
    %394 = vmatpush1.msra.mxu0 0.0
    %395 = vmatprep.subr.mxu0 0.0
    %396 = vmatpush1.msra.mxu0 0.0
    %397 = vmatprep.subr.mxu0 0.0
    %398 = vmatpush1.msra.mxu0 0.0
    %399 = vmatprep.subr.mxu0 0.0
    %400 = vmatpush1.msra.mxu0 0.0
    %401 = vmatprep.subr.mxu0 0.0
    %402 = vmatpush1.msra.mxu0 0.0
    %403 = vmatprep.subr.mxu0 0.0
    %404 = vmatpush1.msra.mxu0 0.0
    %405 = vmatprep.subr.mxu0 0.0
    %406 = vmatpush1.msra.mxu0 0.0
    %407 = vmatprep.subr.mxu0 0.0
    %408 = vmatpush1.msra.mxu0 0.0
    %409 = vmatprep.subr.mxu0 0.0
    %410 = vmatpush1.msra.mxu0 0.0
    %411 = vmatprep.subr.mxu0 0.0
    %412 = vmatpush1.msra.mxu0 0.0
    %413 = vmatprep.subr.mxu0 0.0
    %414 = vmatpush1.msra.mxu0 0.0
    %415 = vmatprep.subr.mxu0 0.0
    %416 = vmatpush1.msra.mxu0 0.0
    %417 = vmatprep.subr.mxu0 0.0
    %418 = vmatpush1.msra.mxu0 0.0
    %419 = vmatprep.subr.mxu0 0.0
    %420 = vmatpush1.msra.mxu0 0.0
    %421 = vmatprep.subr.mxu0 0.0
    %422 = vmatpush1.msra.mxu0 0.0
    %423 = vmatprep.subr.mxu0 0.0
    %424 = vmatpush1.msra.mxu0 0.0
    %425 = vmatprep.subr.mxu0 0.0
    %426 = vmatpush1.msra.mxu0 0.0
    %427 = vmatprep.subr.mxu0 0.0
    %428 = vmatpush1.msra.mxu0 0.0
    %429 = vmatprep.subr.mxu0 0.0
    %430 = vmatpush1.msra.mxu0 0.0
    %431 = vmatprep.subr.mxu0 0.0
    %432 = vmatpush1.msra.mxu0 0.0
    %433 = vmatprep.mubr.f32.mxu0 0.0
    %434 = vmatmul.mubr.f32.gmra.mrb[0].mxu0 %v349
    %v435 = vpop.f32.mrb[0].mxu0
    %v436 = vadd.f32 %v345, %v435
    %v437 = vpop.f32.mrb[0].mxu0
    %438 = vmatprep.mubr.f32.mxu0 0.0
    %439 = vmatmul.mubr.f32.gmra.mrb[0].mxu0 %v352
    %v440 = vpop.f32.mrb[0].mxu0
    %v441 = vadd.f32 %v345, %v440
    %v442 = vpop.f32.mrb[0].mxu0
    %443 = vmatprep.mubr.f32.mxu0 0.0
    %444 = vmatmul.mubr.f32.gmra.mrb[0].mxu0 %v355
    %v445 = vpop.f32.mrb[0].mxu0
    %v446 = vadd.f32 %v345, %v445
    %v447 = vpop.f32.mrb[0].mxu0
    %448 = vmatprep.mubr.f32.mxu0 0.0
    %449 = vmatmul.mubr.f32.gmra.mrb[0].mxu0 %v358
    %v450 = vpop.f32.mrb[0].mxu0
    %v451 = vadd.f32 %v345, %v450
    %v452 = vpop.f32.mrb[0].mxu0
    %453 = vmatprep.mubr.f32.mxu0 0.0
    %454 = vmatmul.mubr.f32.gmra.mrb[0].mxu0 %v361
    %v455 = vpop.f32.mrb[0].mxu0
    %v456 = vadd.f32 %v345, %v455
    %v457 = vpop.f32.mrb[0].mxu0
    %458 = vmatprep.mubr.f32.mxu0 0.0
    %459 = vmatmul.mubr.f32.gmra.mrb[0].mxu0 %v364
    %v460 = vpop.f32.mrb[0].mxu0
    %v461 = vadd.f32 %v345, %v460
    %v462 = vpop.f32.mrb[0].mxu0
    %463 = vmatprep.mubr.f32.mxu0 0.0
    %464 = vmatmul.mubr.f32.gmra.mrb[0].mxu0 %v367
    %v465 = vpop.f32.mrb[0].mxu0
    %v466 = vadd.f32 %v345, %v465
    %v467 = vpop.f32.mrb[0].mxu0
    %468 = vdwg.mxu0
    %vm469 = vcmask 523264
    %470 = vst.msk [vmem:[#allocation2] sm:$0xff] %vm469, %v436
    %471 = vst.msk [vmem:[#allocation2 + $0x8] sm:$0xff] %vm469, %v441
    %472 = vst.msk [vmem:[#allocation2 + $0x10] sm:$0xff] %vm469, %v446
    %473 = vst.msk [vmem:[#allocation2 + $0x18] sm:$0xff] %vm469, %v451
    %474 = vst.msk [vmem:[#allocation2 + $0x20] sm:$0xff] %vm469, %v456
    %475 = vst.msk [vmem:[#allocation2 + $0x28] sm:$0xff] %vm469, %v461
    %476 = vst.msk [vmem:[#allocation2 + $0x30] sm:$0xff] %vm469, %v466
    %v477 = vld [vmem:[%s4] sm:$0xff]
    %v478 = vld [vmem:[%s4 + $0x8] sm:$0xff]
    loop: start=0, step=1, limit=7
    $region38: #{tpu_custom_call.1} parent=1 // loop_pre_header
      _
    $region39: #{tpu_custom_call.1} parent=1 // loop_header
      %s480 = sphi 0, %s484
      %p481 = scmp.ge.s32.totalorder %s480, 7
      %v485 = vphi 0.0, %v674
      %v486 = vphi 0.0, %v668
    $region40: #{tpu_custom_call.1} parent=1 // loop_header_branch
      %483 = sbr.rel (%p481) target = $region44
    $region41: #{tpu_custom_call.1} parent=1 // loop_body
      %s487 = smul.u32 %s480, 8
      %489 = vset.pattern.permute.xlu0 32
      %490 = vperm.xlu0 %489, %v485
      %v491 = vpop.permute.xlu0 %490
      %v493 = vlaneseq
      %v494 = vshrl.u32 %v493, 7
      %v495 = vsub.s32 0, %v494
      %v496 = vrot.slane %v477, %v495
      %v497 = vmul.f32 %v491, %v496
      %498 = vset.pattern.permute.xlu0 33
      %499 = vperm.xlu0 %498, %v485
      %v500 = vpop.permute.xlu0 %499
      %v502 = vlaneseq
      %v503 = vshrl.u32 %v502, 7
      %v504 = vsub.s32 1, %v503
      %v505 = vrot.slane %v477, %v504
      %v506 = vmul.f32 %v500, %v505
      %507 = vset.pattern.permute.xlu0 34
      %508 = vperm.xlu0 %507, %v485
      %v509 = vpop.permute.xlu0 %508
      %v511 = vlaneseq
      %v512 = vshrl.u32 %v511, 7
      %v513 = vsub.s32 2, %v512
      %v514 = vrot.slane %v477, %v513
      %v515 = vmul.f32 %v509, %v514
      %516 = vset.pattern.permute.xlu0 35
      %517 = vperm.xlu0 %516, %v485
      %v518 = vpop.permute.xlu0 %517
      %v520 = vlaneseq
      %v521 = vshrl.u32 %v520, 7
      %v522 = vsub.s32 3, %v521
      %v523 = vrot.slane %v477, %v522
      %v524 = vmul.f32 %v518, %v523
      %525 = vset.pattern.permute.xlu0 36
      %526 = vperm.xlu0 %525, %v485
      %v527 = vpop.permute.xlu0 %526
      %v529 = vlaneseq
      %v530 = vshrl.u32 %v529, 7
      %v531 = vsub.s32 4, %v530
      %v532 = vrot.slane %v477, %v531
      %v533 = vmul.f32 %v527, %v532
      %534 = vset.pattern.permute.xlu0 37
      %535 = vperm.xlu0 %534, %v485
      %v536 = vpop.permute.xlu0 %535
      %v538 = vlaneseq
      %v539 = vshrl.u32 %v538, 7
      %v540 = vsub.s32 5, %v539
      %v541 = vrot.slane %v477, %v540
      %v542 = vmul.f32 %v536, %v541
      %543 = vset.pattern.permute.xlu0 38
      %544 = vperm.xlu0 %543, %v485
      %v545 = vpop.permute.xlu0 %544
      %v547 = vlaneseq
      %v548 = vshrl.u32 %v547, 7
      %v549 = vsub.s32 6, %v548
      %v550 = vrot.slane %v477, %v549
      %v551 = vmul.f32 %v545, %v550
      %552 = vset.pattern.permute.xlu0 39
      %553 = vperm.xlu0 %552, %v485
      %v554 = vpop.permute.xlu0 %553
      %v556 = vlaneseq
      %v557 = vshrl.u32 %v556, 7
      %v558 = vsub.s32 7, %v557
      %v559 = vrot.slane %v477, %v558
      %v560 = vmul.f32 %v554, %v559
      %561 = vset.pattern.permute.xlu0 40
      %562 = vperm.xlu0 %561, %v485
      %v563 = vpop.permute.xlu0 %562
      %v565 = vlaneseq
      %v566 = vshrl.u32 %v565, 7
      %v567 = vsub.s32 0, %v566
      %v568 = vrot.slane %v478, %v567
      %v569 = vmul.f32 %v563, %v568
      %570 = vset.pattern.permute.xlu0 41
      %571 = vperm.xlu0 %570, %v485
      %v572 = vpop.permute.xlu0 %571
      %v574 = vlaneseq
      %v575 = vshrl.u32 %v574, 7
      %v576 = vsub.s32 1, %v575
      %v577 = vrot.slane %v478, %v576
      %v578 = vmul.f32 %v572, %v577
      %579 = vset.pattern.permute.xlu0 42
      %580 = vperm.xlu0 %579, %v485
      %v581 = vpop.permute.xlu0 %580
      %v583 = vlaneseq
      %v584 = vshrl.u32 %v583, 7
      %v585 = vsub.s32 2, %v584
      %v586 = vrot.slane %v478, %v585
      %v587 = vmul.f32 %v581, %v586
      %588 = vset.pattern.permute.xlu0 43
      %589 = vperm.xlu0 %588, %v485
      %v590 = vpop.permute.xlu0 %589
      %v592 = vlaneseq
      %v593 = vshrl.u32 %v592, 7
      %v594 = vsub.s32 3, %v593
      %v595 = vrot.slane %v478, %v594
      %v596 = vmul.f32 %v590, %v595
      %597 = vset.pattern.permute.xlu0 44
      %598 = vperm.xlu0 %597, %v485
      %v599 = vpop.permute.xlu0 %598
      %v601 = vlaneseq
      %v602 = vshrl.u32 %v601, 7
      %v603 = vsub.s32 4, %v602
      %v604 = vrot.slane %v478, %v603
      %v605 = vmul.f32 %v599, %v604
      %606 = vset.pattern.permute.xlu0 45
      %607 = vperm.xlu0 %606, %v485
      %v608 = vpop.permute.xlu0 %607
      %v610 = vlaneseq
      %v611 = vshrl.u32 %v610, 7
      %v612 = vsub.s32 5, %v611
      %v613 = vrot.slane %v478, %v612
      %v614 = vmul.f32 %v608, %v613
      %615 = vset.pattern.permute.xlu0 46
      %616 = vperm.xlu0 %615, %v485
      %v617 = vpop.permute.xlu0 %616
      %v619 = vlaneseq
      %v620 = vshrl.u32 %v619, 7
      %v621 = vsub.s32 6, %v620
      %v622 = vrot.slane %v478, %v621
      %v623 = vmul.f32 %v617, %v622
      %624 = vset.pattern.permute.xlu0 47
      %625 = vperm.xlu0 %624, %v485
      %v626 = vpop.permute.xlu0 %625
      %v628 = vlaneseq
      %v629 = vshrl.u32 %v628, 7
      %v630 = vsub.s32 7, %v629
      %v631 = vrot.slane %v478, %v630
      %v632 = vmul.f32 %v626, %v631
      %v633 = vadd.f32 %v497, %v506
      %v634 = vadd.f32 %v515, %v524
      %v635 = vadd.f32 %v533, %v542
      %v636 = vadd.f32 %v551, %v560
      %v637 = vadd.f32 %v569, %v578
      %v638 = vadd.f32 %v587, %v596
      %v639 = vadd.f32 %v605, %v614
      %v640 = vadd.f32 %v623, %v632
      %v641 = vadd.f32 %v633, %v634
      %v642 = vadd.f32 %v635, %v636
      %v643 = vadd.f32 %v637, %v638
      %v644 = vadd.f32 %v639, %v640
      %v645 = vadd.f32 %v641, %v642
      %v646 = vadd.f32 %v643, %v644
      %v647 = vadd.f32 %v645, %v646
      %s648 = scalar_lea.vmem [#allocation2], %s487
      %v649 = vld [vmem:[%s648] sm:$0xff]
      %v650 = vadd.f32 %v649, %v647
      %v651 = vxor.u32 %v650, 2147483648
      %v652 = vmul.f32 %v651, 1.442695
      %v653 = vpow.pop %v652
      %v654 = vadd.f32 %v653, 1.0
      %v655 = vrcp.pop %v654
      %v656 = vmul.f32 1.0, %v655
      %v657 = vtanh.pop %v650
      %v658 = vmul.f32 %v656, %v486
      %660 = vrot.lane.b32.xlu0 %v657, 80
      %v661 = vpop.permute.xlu0 %660
      %v663 = vmul.f32 %v656, %v661
      %665 = vrot.lane.b32.xlu0 %v663, 16
      %v666 = vpop.permute.xlu0 %665
      %v668 = vadd.f32 %v658, %v666
      %v669 = vtanh.pop %v668
      %671 = vrot.lane.b32.xlu0 %v669, 16
      %v672 = vpop.permute.xlu0 %671
      %v674 = vmul.f32 %v656, %v672
      %676 = vrot.lane.b32.xlu0 %v674, 96
      %v677 = vpop.permute.xlu0 %676
      %s679 = scalar_lea.vmem [#allocation3], %s487
      %vm680 = vcmask 130048
      %681 = vst.msk [vmem:[%s679] sm:$0xff] %vm680, %v677
    $region42: #{tpu_custom_call.1} parent=1 // loop_footer
      %s484 = sadd.s32 1, %s480
    $region43: #{tpu_custom_call.1} parent=1 // loop_footer_branch
      %479 = sbr.rel target = $region39
    $region44: #{tpu_custom_call.1} parent=1 // loop_exit
      _
    %v682 = vld [vmem:[#allocation3] sm:$0xff]
    %v683 = vld [vmem:[#allocation3 + $0x8] sm:$0xff]
    %v684 = vld [vmem:[#allocation3 + $0x10] sm:$0xff]
    %v685 = vld [vmem:[#allocation3 + $0x18] sm:$0xff]
    %v686 = vld [vmem:[#allocation3 + $0x20] sm:$0xff]
    %v687 = vld [vmem:[#allocation3 + $0x28] sm:$0xff]
    %v688 = vld [vmem:[#allocation3 + $0x30] sm:$0xff]
    %v689 = vld [vmem:[%s6] sm:$0xff]
    %v690 = vld [vmem:[%s6 + $0x8] sm:$0xff]
    %v691 = vld [vmem:[%s7] sm:$0x1]
    %v693 = vlaneseq
    %v694 = vshrl.u32 %v693, 7
    %v695 = vsub.s32 0, %v694
    %v696 = vrot.slane %v691, %v695
    %vm698 = vcmask 130048
    %v700 = vsel %vm698, %v682, 0
    %v703 = vsel %vm698, %v683, 0
    %v706 = vsel %vm698, %v684, 0
    %v709 = vsel %vm698, %v685, 0
    %v712 = vsel %vm698, %v686, 0
    %v715 = vsel %vm698, %v687, 0
    %v718 = vsel %vm698, %v688, 0
    %720 = vmatprep.subr.mxu0 0.0
    %721 = vmatpush1.msra.mxu0 %v689
    %722 = vmatprep.subr.mxu0 0.0
    %723 = vmatpush1.msra.mxu0 %v690
    %724 = vmatprep.subr.mxu0 0.0
    %725 = vmatpush1.msra.mxu0 0.0
    %726 = vmatprep.subr.mxu0 0.0
    %727 = vmatpush1.msra.mxu0 0.0
    %728 = vmatprep.subr.mxu0 0.0
    %729 = vmatpush1.msra.mxu0 0.0
    %730 = vmatprep.subr.mxu0 0.0
    %731 = vmatpush1.msra.mxu0 0.0
    %732 = vmatprep.subr.mxu0 0.0
    %733 = vmatpush1.msra.mxu0 0.0
    %734 = vmatprep.subr.mxu0 0.0
    %735 = vmatpush1.msra.mxu0 0.0
    %736 = vmatprep.subr.mxu0 0.0
    %737 = vmatpush1.msra.mxu0 0.0
    %738 = vmatprep.subr.mxu0 0.0
    %739 = vmatpush1.msra.mxu0 0.0
    %740 = vmatprep.subr.mxu0 0.0
    %741 = vmatpush1.msra.mxu0 0.0
    %742 = vmatprep.subr.mxu0 0.0
    %743 = vmatpush1.msra.mxu0 0.0
    %744 = vmatprep.subr.mxu0 0.0
    %745 = vmatpush1.msra.mxu0 0.0
    %746 = vmatprep.subr.mxu0 0.0
    %747 = vmatpush1.msra.mxu0 0.0
    %748 = vmatprep.subr.mxu0 0.0
    %749 = vmatpush1.msra.mxu0 0.0
    %750 = vmatprep.subr.mxu0 0.0
    %751 = vmatpush1.msra.mxu0 0.0
    %752 = vmatprep.subr.mxu0 0.0
    %753 = vmatpush1.msra.mxu0 0.0
    %754 = vmatprep.subr.mxu0 0.0
    %755 = vmatpush1.msra.mxu0 0.0
    %756 = vmatprep.subr.mxu0 0.0
    %757 = vmatpush1.msra.mxu0 0.0
    %758 = vmatprep.subr.mxu0 0.0
    %759 = vmatpush1.msra.mxu0 0.0
    %760 = vmatprep.subr.mxu0 0.0
    %761 = vmatpush1.msra.mxu0 0.0
    %762 = vmatprep.subr.mxu0 0.0
    %763 = vmatpush1.msra.mxu0 0.0
    %764 = vmatprep.subr.mxu0 0.0
    %765 = vmatpush1.msra.mxu0 0.0
    %766 = vmatprep.subr.mxu0 0.0
    %767 = vmatpush1.msra.mxu0 0.0
    %768 = vmatprep.subr.mxu0 0.0
    %769 = vmatpush1.msra.mxu0 0.0
    %770 = vmatprep.subr.mxu0 0.0
    %771 = vmatpush1.msra.mxu0 0.0
    %772 = vmatprep.subr.mxu0 0.0
    %773 = vmatpush1.msra.mxu0 0.0
    %774 = vmatprep.subr.mxu0 0.0
    %775 = vmatpush1.msra.mxu0 0.0
    %776 = vmatprep.subr.mxu0 0.0
    %777 = vmatpush1.msra.mxu0 0.0
    %778 = vmatprep.subr.mxu0 0.0
    %779 = vmatpush1.msra.mxu0 0.0
    %780 = vmatprep.subr.mxu0 0.0
    %781 = vmatpush1.msra.mxu0 0.0
    %782 = vmatprep.subr.mxu0 0.0
    %783 = vmatpush1.msra.mxu0 0.0
    %784 = vmatprep.mubr.f32.mxu0 0.0
    %785 = vmatmul.mubr.f32.gmra.mrb[0].mxu0 %v700
    %v786 = vpop.f32.mrb[0].mxu0
    %v787 = vadd.f32 %v696, %v786
    %v788 = vpop.f32.mrb[0].mxu0
    %789 = vmatprep.mubr.f32.mxu0 0.0
    %790 = vmatmul.mubr.f32.gmra.mrb[0].mxu0 %v703
    %v791 = vpop.f32.mrb[0].mxu0
    %v792 = vadd.f32 %v696, %v791
    %v793 = vpop.f32.mrb[0].mxu0
    %794 = vmatprep.mubr.f32.mxu0 0.0
    %795 = vmatmul.mubr.f32.gmra.mrb[0].mxu0 %v706
    %v796 = vpop.f32.mrb[0].mxu0
    %v797 = vadd.f32 %v696, %v796
    %v798 = vpop.f32.mrb[0].mxu0
    %799 = vmatprep.mubr.f32.mxu0 0.0
    %800 = vmatmul.mubr.f32.gmra.mrb[0].mxu0 %v709
    %v801 = vpop.f32.mrb[0].mxu0
    %v802 = vadd.f32 %v696, %v801
    %v803 = vpop.f32.mrb[0].mxu0
    %804 = vmatprep.mubr.f32.mxu0 0.0
    %805 = vmatmul.mubr.f32.gmra.mrb[0].mxu0 %v712
    %v806 = vpop.f32.mrb[0].mxu0
    %v807 = vadd.f32 %v696, %v806
    %v808 = vpop.f32.mrb[0].mxu0
    %809 = vmatprep.mubr.f32.mxu0 0.0
    %810 = vmatmul.mubr.f32.gmra.mrb[0].mxu0 %v715
    %v811 = vpop.f32.mrb[0].mxu0
    %v812 = vadd.f32 %v696, %v811
    %v813 = vpop.f32.mrb[0].mxu0
    %814 = vmatprep.mubr.f32.mxu0 0.0
    %815 = vmatmul.mubr.f32.gmra.mrb[0].mxu0 %v718
    %v816 = vpop.f32.mrb[0].mxu0
    %v817 = vadd.f32 %v696, %v816
    %v818 = vpop.f32.mrb[0].mxu0
    %819 = vdwg.mxu0
    %820 = vst.msk [vmem:[#allocation4] sm:$0xff] %vm347, %v787
    %821 = vst.msk [vmem:[#allocation4 + $0x8] sm:$0xff] %vm347, %v792
    %822 = vst.msk [vmem:[#allocation4 + $0x10] sm:$0xff] %vm347, %v797
    %823 = vst.msk [vmem:[#allocation4 + $0x18] sm:$0xff] %vm347, %v802
    %824 = vst.msk [vmem:[#allocation4 + $0x20] sm:$0xff] %vm347, %v807
    %825 = vst.msk [vmem:[#allocation4 + $0x28] sm:$0xff] %vm347, %v812
    %826 = vst.msk [vmem:[#allocation4 + $0x30] sm:$0xff] %vm347, %v817
    %v827 = vld [vmem:[%s8] sm:$0x1]
    %v828 = vlaneseq
    %v829 = vand.u32 %v828, 127
    %v830 = vand.u32 %v829, 1
    %vm831 = vcmp.eq.s32.totalorder %v830, 0
    loop: start=0, step=1, limit=7
    $region45: #{tpu_custom_call.1} parent=1 // loop_pre_header
      _
    $region46: #{tpu_custom_call.1} parent=1 // loop_header
      %s833 = sphi 0, %s837
      %p834 = scmp.ge.s32.totalorder %s833, 7
      %v838 = vphi 0.0, %v899
      %v839 = vphi 0.0, %v893
      %v840 = vphi 0.0, %v909
      %v841 = vphi 0.0, %v918
    $region47: #{tpu_custom_call.1} parent=1 // loop_header_branch
      %836 = sbr.rel (%p834) target = $region51
    $region48: #{tpu_custom_call.1} parent=1 // loop_body
      %s842 = ssub.s32 6, %s833
      %s843 = smul.u32 %s833, 8
      %s844 = scalar_lea.vmem [#allocation4], %s843
      %v845 = vld [vmem:[%s844] sm:$0xff]
      %s846 = smul.u32 %s842, 8
      %s847 = scalar_lea.vmem [#allocation4], %s846
      %v848 = vld [vmem:[%s847] sm:$0xff]
      %v849 = vsel %vm831, 1, 0
      %vm850 = vcmp.eq.s32.totalorder %v849, 1
      %v851 = vsel %vm850, %v845, %v848
      %853 = vrot.lane.b32.xlu0 %v838, 124
      %v854 = vpop.permute.xlu0 %853
      %856 = vrot.lane.b32.xlu0 %v838, 126
      %v857 = vpop.permute.xlu0 %856
      %859 = vrot.lane.b32.xlu0 %v838, 2
      %v860 = vpop.permute.xlu0 %859
      %vm862 = vcmask 15360
      %v863 = vsel %vm862, %v854, %v857
      %vm864 = vcmask 31744
      %v865 = vsel %vm864, %v863, %v838
      %vm866 = vcmask 48128
      %v867 = vsel %vm866, %v865, %v860
      %v869 = vlaneseq
      %v870 = vshrl.u32 %v869, 7
      %v871 = vsub.s32 0, %v870
      %v872 = vrot.slane %v827, %v871
      %v874 = vmul.f32 %v867, %v872
      %v875 = vadd.f32 %v851, %v874
      %v876 = vxor.u32 %v875, 2147483648
      %v877 = vmul.f32 %v876, 1.442695
      %v878 = vpow.pop %v877
      %v879 = vadd.f32 %v878, 1.0
      %v880 = vrcp.pop %v879
      %v881 = vmul.f32 1.0, %v880
      %v882 = vtanh.pop %v875
      %v883 = vmul.f32 %v881, %v839
      %885 = vrot.lane.b32.xlu0 %v882, 122
      %v886 = vpop.permute.xlu0 %885
      %v888 = vmul.f32 %v881, %v886
      %890 = vrot.lane.b32.xlu0 %v888, 2
      %v891 = vpop.permute.xlu0 %890
      %v893 = vadd.f32 %v883, %v891
      %v894 = vtanh.pop %v893
      %896 = vrot.lane.b32.xlu0 %v894, 2
      %v897 = vpop.permute.xlu0 %896
      %v899 = vmul.f32 %v881, %v897
      %v900 = vstv %s833
      %vm901 = vcmp.eq.s32.totalorder %v829, %v900
      %v902 = vsel %vm901, 1, 0
      %vm903 = vcmp.eq.s32.totalorder %v902, 1
      %905 = vset.pattern.permute.xlu0 4
      %906 = vperm.xlu0 %905, %v899
      %v907 = vpop.permute.xlu0 %906
      %v909 = vsel %vm903, %v907, %v840
      %v910 = vstv %s842
      %vm911 = vcmp.eq.s32.totalorder %v829, %v910
      %v912 = vsel %vm911, 1, 0
      %vm913 = vcmp.eq.s32.totalorder %v912, 1
      %914 = vset.pattern.permute.xlu0 5
      %915 = vperm.xlu0 %914, %v899
      %v916 = vpop.permute.xlu0 %915
      %v918 = vsel %vm913, %v916, %v841
    $region49: #{tpu_custom_call.1} parent=1 // loop_footer
      %s837 = sadd.s32 1, %s833
    $region50: #{tpu_custom_call.1} parent=1 // loop_footer_branch
      %832 = sbr.rel target = $region46
    $region51: #{tpu_custom_call.1} parent=1 // loop_exit
      _
    %v919 = vadd.f32 %v840, %v841
    %vm920 = vcmask 56320
    %921 = vst.msk [vmem:[#allocation5] sm:$0xff] %vm920, %v919
    // Predicated region
    $region52: #{tpu_custom_call.1} parent=1 // pred_check
      _
    $region53: #{tpu_custom_call.1} parent=1 // pred_check_branch
      %923 = sbr.rel (0) target = $region55
    $region54: #{tpu_custom_call.1} parent=1 // pred_region
      %s925 = ssub.s32 128, 128
      %926 = vsyncadd [#allocation6], %s925
      %s928 = sshll.u32 [#allocation5], 4
      %s929 = int_to_ptr.vmem [resolvable:$true] %s928
      %931 = dma.vmem_to_hbm [thread:$0]  %s929, 128, %s9, [#allocation6]
    $region55: #{tpu_custom_call.1} parent=1 // pred_fallthru
      _
    // Predicated region
    $region56: #{tpu_custom_call.1} parent=1 // pred_check
      _
    $region57: #{tpu_custom_call.1} parent=1 // pred_check_branch
      %933 = sbr.rel (0) target = $region59
    $region58: #{tpu_custom_call.1} parent=1 // pred_region
      %934 = dma.done [#allocation6], 128
    $region59: #{tpu_custom_call.1} parent=1 // pred_fallthru
      _
    %935 = vsyncpa [#allocation6], 1

</llo_original>
